<compile_context>
chip_gen: v7x
topology: tpu7x:2x2x1
jax: 0.10.0
libtpu: 0.0.40
codegen_flags: <defaults>
</compile_context>

<pallas_src>
import itertools
import math

import jax
import jax.numpy as jnp
from jax import lax
from jax.experimental import pallas as pl
from jax.experimental.pallas import tpu as pltpu

_MiB = 1024 * 1024
_UNROLL_LIMIT = 64                   # static-unroll threshold for in-kernel loops
_DEFAULT_SCOPED_VMEM = 16 * _MiB     # smallest default scoped VMEM (v5e)


# ----------------------------------------------------------------------------
# small helpers
# ----------------------------------------------------------------------------
def _prod(xs):
    return int(math.prod(xs))


def _round_up(x, m):
    return ((x + m - 1) // m) * m


def _divisors(n):
    out = set()
    i = 1
    while i * i <= n:
        if n % i == 0:
            out.add(i)
            out.add(n // i)
        i += 1
    return sorted(out)


def _tile_candidates(dim, align):
    """Legal tile sizes for a swapped dim: the full dim, or divisors that are
    multiples of `align` (keeps both the input and mirrored output BlockSpecs
    layout-legal and dtype-packing aligned)."""
    cands = {dim}
    for d in _divisors(dim):
        if d != dim and d % align == 0:
            cands.add(d)
    return sorted(cands, reverse=True)


def _pick_tiles(cand_lists, bytes_fn, budget):
    """Largest tile combo whose padded in+out VMEM footprint fits `budget`.
    Falls back to the smallest-footprint combo when nothing fits (correctness
    first; caller raises vmem_limit_bytes accordingly)."""
    best, best_key = None, None
    smallest, smallest_bytes = None, None
    for combo in itertools.product(*cand_lists):
        b = bytes_fn(*combo)
        if smallest is None or b < smallest_bytes:
            smallest, smallest_bytes = combo, b
        if b <= budget:
            key = (math.prod(combo), min(combo))
            if best is None or key > best_key:
                best, best_key = combo, key
    if best is not None:
        return best, bytes_fn(*best)
    return smallest, smallest_bytes


def _hw_params():
    """(pair_budget, vmem_limit_cap, multi_tc): padded in+out bytes allowed per
    grid step, cap for vmem_limit_bytes, and whether the chip has 2 TCs."""
    kind = ""
    try:
        kind = jax.devices()[0].device_kind.lower()
    except Exception:
        pass
    vmem_cap = None
    try:
        vmem_cap = int(pltpu.get_tpu_info().vmem_capacity_bytes)
    except Exception:
        pass

    if "v6" in kind:                                           # 128 MiB VMEM, 1 TC
        pair_budget, cap, multi_tc = 24 * _MiB, 100 * _MiB, False
    elif "v5" in kind and ("lite" in kind or "5e" in kind):    # v5e: 128 MiB, 1 TC
        pair_budget, cap, multi_tc = 16 * _MiB, 96 * _MiB, False
    elif "7" in kind:                                          # v7x: 64 MiB, 2 TCs
        pair_budget, cap, multi_tc = 12 * _MiB, 48 * _MiB, True
    else:                                                      # unknown: conservative
        pair_budget, cap, multi_tc = 12 * _MiB, 48 * _MiB, False

    if vmem_cap is not None:
        cap = min(cap, max(16 * _MiB, vmem_cap - 12 * _MiB))
        pair_budget = min(pair_budget, max(2 * _MiB, cap // 3))
    return pair_budget, cap, multi_tc


def _compiler_params(num_grid_axes, pair_bytes, vmem_cap_limit):
    # Double-buffered in+out blocks plus slack; only raise the scoped-VMEM limit
    # when the default would not hold the pipeline.
    needed = 2 * pair_bytes + 2 * _MiB
    vmem_limit = None
    if needed > _DEFAULT_SCOPED_VMEM:
        vmem_limit = int(min(needed + 4 * _MiB, vmem_cap_limit))
    return pltpu.CompilerParams(
        dimension_semantics=("parallel",) * num_grid_axes,
        vmem_limit_bytes=vmem_limit,
    )


# ----------------------------------------------------------------------------
# kernels
# ----------------------------------------------------------------------------
def _xlu_kernel_2d(x_ref, o_ref):
    # (ta, tb) -> (tb, ta): single lane-dense XLU tile transpose.
    o_ref[...] = x_ref[...].T


def _make_xlu_kernel_3d(tm):
    # x_ref: (ta, tm, tb), o_ref: (tb, tm, ta); per-m 2-D XLU tile transpose.
    if tm <= _UNROLL_LIMIT:
        def kernel(x_ref, o_ref):
            for m in range(tm):
                o_ref[:, m, :] = x_ref[:, m, :].T
    else:
        def kernel(x_ref, o_ref):
            def body(m, carry):
                o_ref[:, m, :] = x_ref[:, m, :].T
                return carry
            lax.fori_loop(0, tm, body, 0, unroll=4)
    return kernel


def _make_slab_kernel(ta, tb):
    """Copies an (ta, tb, I) input block into a (tb, ta, I) output block using
    per-row slab copies.  Store-contiguous variant (full-tile unmasked stores,
    strided loads) is preferred unless tb is much larger than ta."""
    loop_over_b = tb <= 4 * ta          # store-contiguous bias
    if loop_over_b:
        n = tb

        def step(i, x_ref, o_ref):
            o_ref[i, :, :] = x_ref[:, i, :]
    else:
        n = ta

        def step(i, x_ref, o_ref):
            o_ref[:, i, :] = x_ref[i, :, :]

    if n <= _UNROLL_LIMIT:
        def kernel(x_ref, o_ref):
            for i in range(n):
                step(i, x_ref, o_ref)
    else:
        def kernel(x_ref, o_ref):
            def body(i, carry):
                step(i, x_ref, o_ref)
                return carry
            lax.fori_loop(0, n, body, 0, unroll=8)
    return kernel


# ----------------------------------------------------------------------------
# paths
# ----------------------------------------------------------------------------
def _transpose_i1_xlu(x, O, A, M, B, sub, pair_budget, vmem_cap_limit, multi_tc):
    """Fast path for I == 1 (transpose involving the last axis), 32-bit dtypes.
    Lane-dense DMAs on both sides + in-kernel XLU 2-D tile transpose.
    Returns None when the tile legality/safety guards fail (caller falls back)."""
    isz = jnp.dtype(x.dtype).itemsize
    ta_cands = _tile_candidates(A, 128)   # output lane dim: %128 or full
    tb_cands = _tile_candidates(B, 128)   # input  lane dim: %128 or full

    if M == 1:
        def bytes_fn(ta, tb):
            return (_round_up(ta, sub) * _round_up(tb, 128)
                    + _round_up(tb, sub) * _round_up(ta, 128)) * isz

        (ta, tb), pair_bytes = _pick_tiles([ta_cands, tb_cands], bytes_fn, pair_budget)
        if ta % 8 or tb % 8:        # keep the XLU transpose on tile-friendly shapes
            return None
        na, nb = A // ta, B // tb
        if multi_tc and O * na * nb == 1:          # keep both v7x TCs busy
            if tb % 256 == 0:
                tb //= 2
                nb = 2
            elif ta % 256 == 0:
                ta //= 2
                na = 2
        pair_bytes = bytes_fn(ta, tb)

        x3 = x.reshape(O, A, B)
        grid = (O, na, nb)
        return pl.pallas_call(
            _xlu_kernel_2d,
            out_shape=jax.ShapeDtypeStruct((O, B, A), x.dtype),
            grid_spec=pltpu.PrefetchScalarGridSpec(
                num_scalar_prefetch=0,
                grid=grid,
                in_specs=[pl.BlockSpec((None, ta, tb),
                                       lambda o, ia, ib: (o, ia, ib))],
                out_specs=pl.BlockSpec((None, tb, ta),
                                       lambda o, ia, ib: (o, ib, ia)),
            ),
            compiler_params=_compiler_params(len(grid), pair_bytes, vmem_cap_limit),
        )(x3)

    # M > 1: keep full (or 8-aligned) M in the block; transpose per m-slice.
    tm_cands = _tile_candidates(M, sub)

    def bytes_fn(ta, tm, tb):
        return (ta * _round_up(tm, sub) * _round_up(tb, 128)
                + tb * _round_up(tm, sub) * _round_up(ta, 128)) * isz

    (ta, tm, tb), pair_bytes = _pick_tiles([ta_cands, tm_cands, tb_cands],
                                           bytes_fn, pair_budget)
    if ta % 8 or tb % 8:
        return None

    x4 = x.reshape(O, A, M, B)
    grid = (O, M // tm, A // ta, B // tb)
    kernel = _make_xlu_kernel_3d(tm)
    return pl.pallas_call(
        kernel,
        out_shape=jax.ShapeDtypeStruct((O, B, M, A), x.dtype),
        grid_spec=pltpu.PrefetchScalarGridSpec(
            num_scalar_prefetch=0,
            grid=grid,
            in_specs=[pl.BlockSpec((None, ta, tm, tb),
                                   lambda o, im, ia, ib: (o, ia, im, ib))],
            out_specs=pl.BlockSpec((None, tb, tm, ta),
                                   lambda o, im, ia, ib: (o, ib, im, ia)),
        ),
        compiler_params=_compiler_params(len(grid), pair_bytes, vmem_cap_limit),
    )(x4)


def _transpose_slab(x, O, A, M, B, I, sub, isz, pair_budget, vmem_cap_limit, multi_tc):
    """General path: blocks (ta, tb, I) -> (tb, ta, I) with per-row slab copies."""
    ta_cands = _tile_candidates(A, sub)   # output second-minor: %sub or full
    tb_cands = _tile_candidates(B, sub)   # input  second-minor: %sub or full
    lane_I = _round_up(I, 128)

    def bytes_fn(ta, tb):
        return (ta * _round_up(tb, sub) * lane_I
                + tb * _round_up(ta, sub) * lane_I) * isz

    (ta, tb), pair_bytes = _pick_tiles([ta_cands, tb_cands], bytes_fn, pair_budget)
    na, nb = A // ta, B // tb

    # Only split a collapsed grid on 2-TensorCore chips (v7x); even step count.
    if multi_tc and O * M * na * nb == 1:
        if tb % (2 * sub) == 0 and ta * (tb // 2) * I >= 1024:
            tb //= 2
            nb = 2
        elif ta % (2 * sub) == 0 and (ta // 2) * tb * I >= 1024:
            ta //= 2
            na = 2
    pair_bytes = bytes_fn(ta, tb)

    x_c = x.reshape(O, A, M, B, I)
    grid = (O, M, na, nb)
    kernel = _make_slab_kernel(ta, tb)
    return pl.pallas_call(
        kernel,
        out_shape=jax.ShapeDtypeStruct((O, B, M, A, I), x.dtype),
        grid_spec=pltpu.PrefetchScalarGridSpec(
            num_scalar_prefetch=0,
            grid=grid,
            in_specs=[pl.BlockSpec((None, ta, None, tb, I),
                                   lambda o, m, ia, ib: (o, ia, m, ib, 0))],
            out_specs=pl.BlockSpec((None, tb, None, ta, I),
                                   lambda o, m, ia, ib: (o, ib, m, ia, 0)),
        ),
        compiler_params=_compiler_params(len(grid), pair_bytes, vmem_cap_limit),
    )(x_c)


# ----------------------------------------------------------------------------
# public API
# ----------------------------------------------------------------------------
def pallas_transpose(x, dim1, dim2):
    """Equivalent of torch.Tensor.transpose(dim1, dim2) as a Pallas TPU kernel."""
    nd = x.ndim
    if nd == 0:
        return x
    d1 = dim1 % nd
    d2 = dim2 % nd
    if d1 == d2:
        return x
    if d1 > d2:
        d1, d2 = d2, d1
    if x.size == 0:
        return jnp.swapaxes(x, d1, d2)

    S = x.shape
    O = _prod(S[:d1])           # dims before d1
    A = S[d1]                   # first swapped dim
    M = _prod(S[d1 + 1:d2])     # dims between d1 and d2
    B = S[d2]                   # second swapped dim
    I = _prod(S[d2 + 1:])       # trailing contiguous run (lane dim of the slab path)

    itemsize = jnp.dtype(x.dtype).itemsize
    sub = max(8, 32 // itemsize)            # minimum sublane multiple for this dtype
    pair_budget, vmem_cap_limit, multi_tc = _hw_params()

    final_shape = list(S)
    final_shape[d1], final_shape[d2] = final_shape[d2], final_shape[d1]
    final_shape = tuple(final_shape)

    # Fast path: the transpose touches the last axis (I == 1) -> lane-dense
    # XLU 2-D tile transposes for 32-bit dtypes.
    if I == 1 and itemsize == 4:
        y = _transpose_i1_xlu(x, O, A, M, B, sub, pair_budget, vmem_cap_limit, multi_tc)
        if y is not None:
            return y.reshape(final_shape)

    # TODO(synk): for 1 < I < 128 with sub-32-bit dtypes, bitcast element groups
    # to u32 before the slab copies to restore lane density.
    y = _transpose_slab(x, O, A, M, B, I, sub, itemsize,
                        pair_budget, vmem_cap_limit, multi_tc)
    return y.reshape(final_shape)


class Transpose:
    """JAX/Pallas equivalent of the PyTorch Transpose module."""

    def __init__(self, dim1: int, dim2: int, inplace: bool = False):
        self.dim1 = dim1
        self.dim2 = dim2
        # `inplace` has no meaning for immutable JAX arrays; the returned value
        # is identical either way.
        self.inplace = inplace

    def __call__(self, x):
        return pallas_transpose(x, self.dim1, self.dim2)


if __name__ == "__main__":
    key = jax.random.PRNGKey(0)
    x = jax.random.normal(key, (2, 4, 16, 16), dtype=jnp.float32)

    # Primary case: swap channel and height dims of an NCHW feature map,
    # i.e. Transpose(dim1=1, dim2=2) from the PyTorch module.
    mod = Transpose(1, 2)
    y = jax.block_until_ready(mod(x))
    assert y.shape == (2, 16, 4, 16) and y.dtype == x.dtype
    assert jnp.array_equal(y, jnp.swapaxes(x, 1, 2))

    # Additional configurations exercising all code paths.
    cases = [
        ((2, 4, 16, 16), 0, 1),      # swap leading dims (single block)
        ((3, 16, 4, 64), 1, 2),      # B < A, lane-dense slab path
        ((2, 4, 16, 16), 0, 2),      # non-adjacent dims (M > 1)
        ((2, 4, 16, 16), 1, -1),     # I == 1 but A not 8-aligned -> slab fallback
        ((2, 4, 64, 128), 2, 3),     # I == 1, M == 1 -> XLU 2-D tile-transpose path
        ((2, 8, 16, 128), 1, 3),     # I == 1, M > 1  -> XLU per-slice transpose path
        ((2, 8, 16, 128), -2, 1),    # negative dim, I >= 128 lane-dense slab path
    ]
    for shape, dd1, dd2 in cases:
        key, sk = jax.random.split(key)
        xi = jax.random.normal(sk, shape, dtype=jnp.float32)
        yi = jax.block_until_ready(pallas_transpose(xi, dd1, dd2))
        assert jnp.array_equal(yi, jnp.swapaxes(xi, dd1, dd2)), (shape, dd1, dd2)

    print("KERNEL_OK")
</pallas_src>

<mosaic_0001>
module attributes {stable_mosaic.version = 11 : i64} {
  func.func @kernel(%arg0: i32, %arg1: i32, %arg2: i32, %arg3: i32, %arg4: memref<1x4x1x16x16xf32, #tpu.memory_space<vmem>>, %arg5: memref<1x16x1x4x16xf32, #tpu.memory_space<vmem>>) attributes {dimension_semantics = [#tpu.dimension_semantics<parallel>, #tpu.dimension_semantics<parallel>, #tpu.dimension_semantics<parallel>, #tpu.dimension_semantics<parallel>], iteration_bounds = array<i64: 2, 1, 1, 1>, scalar_prefetch = 0 : i64, scratch_operands = 0 : i64, tpu.core_type = #tpu.core_type<tc>, window_params = [{transform_indices = @transform_0, window_bounds = array<i64: 1, 4, 1, 16, 16>}, {transform_indices = @transform_1, window_bounds = array<i64: 1, 16, 1, 4, 16>}]} {
    %c0 = arith.constant 0 : index
    %c0_0 = arith.constant 0 : index
    %c0_1 = arith.constant 0 : index
    %c0_2 = arith.constant 0 : index
    %c0_3 = arith.constant 0 : index
    %0 = vector.load %arg4[%c0, %c0_0, %c0_1, %c0_2, %c0_3] : memref<1x4x1x16x16xf32, #tpu.memory_space<vmem>>, vector<1x4x1x1x16xf32>
    %1 = vector.shape_cast %0 : vector<1x4x1x1x16xf32> to vector<4x16xf32>
    %c0_4 = arith.constant 0 : index
    %c0_5 = arith.constant 0 : index
    %c0_6 = arith.constant 0 : index
    %c0_7 = arith.constant 0 : index
    %c0_8 = arith.constant 0 : index
    %2 = vector.load %arg5[%c0_4, %c0_5, %c0_6, %c0_7, %c0_8] : memref<1x16x1x4x16xf32, #tpu.memory_space<vmem>>, vector<1x1x1x4x16xf32>
    %3 = vector.shape_cast %2 : vector<1x1x1x4x16xf32> to vector<4x16xf32>
    %4 = vector.shape_cast %1 : vector<4x16xf32> to vector<1x1x1x4x16xf32>
    tpu.vector_store %arg5[%c0_4, %c0_5, %c0_6, %c0_7, %c0_8], %4 {strides = array<i32>} : memref<1x16x1x4x16xf32, #tpu.memory_space<vmem>>, vector<1x1x1x4x16xf32>,
    %c0_9 = arith.constant 0 : index
    %c0_10 = arith.constant 0 : index
    %c0_11 = arith.constant 0 : index
    %c1 = arith.constant 1 : index
    %c0_12 = arith.constant 0 : index
    %5 = vector.load %arg4[%c0_9, %c0_10, %c0_11, %c1, %c0_12] : memref<1x4x1x16x16xf32, #tpu.memory_space<vmem>>, vector<1x4x1x1x16xf32>
    %6 = vector.shape_cast %5 : vector<1x4x1x1x16xf32> to vector<4x16xf32>
    %c0_13 = arith.constant 0 : index
    %c1_14 = arith.constant 1 : index
    %c0_15 = arith.constant 0 : index
    %c0_16 = arith.constant 0 : index
    %c0_17 = arith.constant 0 : index
    %7 = vector.load %arg5[%c0_13, %c1_14, %c0_15, %c0_16, %c0_17] : memref<1x16x1x4x16xf32, #tpu.memory_space<vmem>>, vector<1x1x1x4x16xf32>
    %8 = vector.shape_cast %7 : vector<1x1x1x4x16xf32> to vector<4x16xf32>
    %9 = vector.shape_cast %6 : vector<4x16xf32> to vector<1x1x1x4x16xf32>
    tpu.vector_store %arg5[%c0_13, %c1_14, %c0_15, %c0_16, %c0_17], %9 {strides = array<i32>} : memref<1x16x1x4x16xf32, #tpu.memory_space<vmem>>, vector<1x1x1x4x16xf32>,
    %c0_18 = arith.constant 0 : index
    %c0_19 = arith.constant 0 : index
    %c0_20 = arith.constant 0 : index
    %c2 = arith.constant 2 : index
    %c0_21 = arith.constant 0 : index
    %10 = vector.load %arg4[%c0_18, %c0_19, %c0_20, %c2, %c0_21] : memref<1x4x1x16x16xf32, #tpu.memory_space<vmem>>, vector<1x4x1x1x16xf32>
    %11 = vector.shape_cast %10 : vector<1x4x1x1x16xf32> to vector<4x16xf32>
    %c0_22 = arith.constant 0 : index
    %c2_23 = arith.constant 2 : index
    %c0_24 = arith.constant 0 : index
    %c0_25 = arith.constant 0 : index
    %c0_26 = arith.constant 0 : index
    %12 = vector.load %arg5[%c0_22, %c2_23, %c0_24, %c0_25, %c0_26] : memref<1x16x1x4x16xf32, #tpu.memory_space<vmem>>, vector<1x1x1x4x16xf32>
    %13 = vector.shape_cast %12 : vector<1x1x1x4x16xf32> to vector<4x16xf32>
    %14 = vector.shape_cast %11 : vector<4x16xf32> to vector<1x1x1x4x16xf32>
    tpu.vector_store %arg5[%c0_22, %c2_23, %c0_24, %c0_25, %c0_26], %14 {strides = array<i32>} : memref<1x16x1x4x16xf32, #tpu.memory_space<vmem>>, vector<1x1x1x4x16xf32>,
    %c0_27 = arith.constant 0 : index
    %c0_28 = arith.constant 0 : index
    %c0_29 = arith.constant 0 : index
    %c3 = arith.constant 3 : index
    %c0_30 = arith.constant 0 : index
    %15 = vector.load %arg4[%c0_27, %c0_28, %c0_29, %c3, %c0_30] : memref<1x4x1x16x16xf32, #tpu.memory_space<vmem>>, vector<1x4x1x1x16xf32>
    %16 = vector.shape_cast %15 : vector<1x4x1x1x16xf32> to vector<4x16xf32>
    %c0_31 = arith.constant 0 : index
    %c3_32 = arith.constant 3 : index
    %c0_33 = arith.constant 0 : index
    %c0_34 = arith.constant 0 : index
    %c0_35 = arith.constant 0 : index
    %17 = vector.load %arg5[%c0_31, %c3_32, %c0_33, %c0_34, %c0_35] : memref<1x16x1x4x16xf32, #tpu.memory_space<vmem>>, vector<1x1x1x4x16xf32>
    %18 = vector.shape_cast %17 : vector<1x1x1x4x16xf32> to vector<4x16xf32>
    %19 = vector.shape_cast %16 : vector<4x16xf32> to vector<1x1x1x4x16xf32>
    tpu.vector_store %arg5[%c0_31, %c3_32, %c0_33, %c0_34, %c0_35], %19 {strides = array<i32>} : memref<1x16x1x4x16xf32, #tpu.memory_space<vmem>>, vector<1x1x1x4x16xf32>,
    %c0_36 = arith.constant 0 : index
    %c0_37 = arith.constant 0 : index
    %c0_38 = arith.constant 0 : index
    %c4 = arith.constant 4 : index
    %c0_39 = arith.constant 0 : index
    %20 = vector.load %arg4[%c0_36, %c0_37, %c0_38, %c4, %c0_39] : memref<1x4x1x16x16xf32, #tpu.memory_space<vmem>>, vector<1x4x1x1x16xf32>
    %21 = vector.shape_cast %20 : vector<1x4x1x1x16xf32> to vector<4x16xf32>
    %c0_40 = arith.constant 0 : index
    %c4_41 = arith.constant 4 : index
    %c0_42 = arith.constant 0 : index
    %c0_43 = arith.constant 0 : index
    %c0_44 = arith.constant 0 : index
    %22 = vector.load %arg5[%c0_40, %c4_41, %c0_42, %c0_43, %c0_44] : memref<1x16x1x4x16xf32, #tpu.memory_space<vmem>>, vector<1x1x1x4x16xf32>
    %23 = vector.shape_cast %22 : vector<1x1x1x4x16xf32> to vector<4x16xf32>
    %24 = vector.shape_cast %21 : vector<4x16xf32> to vector<1x1x1x4x16xf32>
    tpu.vector_store %arg5[%c0_40, %c4_41, %c0_42, %c0_43, %c0_44], %24 {strides = array<i32>} : memref<1x16x1x4x16xf32, #tpu.memory_space<vmem>>, vector<1x1x1x4x16xf32>,
    %c0_45 = arith.constant 0 : index
    %c0_46 = arith.constant 0 : index
    %c0_47 = arith.constant 0 : index
    %c5 = arith.constant 5 : index
    %c0_48 = arith.constant 0 : index
    %25 = vector.load %arg4[%c0_45, %c0_46, %c0_47, %c5, %c0_48] : memref<1x4x1x16x16xf32, #tpu.memory_space<vmem>>, vector<1x4x1x1x16xf32>
    %26 = vector.shape_cast %25 : vector<1x4x1x1x16xf32> to vector<4x16xf32>
    %c0_49 = arith.constant 0 : index
    %c5_50 = arith.constant 5 : index
    %c0_51 = arith.constant 0 : index
    %c0_52 = arith.constant 0 : index
    %c0_53 = arith.constant 0 : index
    %27 = vector.load %arg5[%c0_49, %c5_50, %c0_51, %c0_52, %c0_53] : memref<1x16x1x4x16xf32, #tpu.memory_space<vmem>>, vector<1x1x1x4x16xf32>
    %28 = vector.shape_cast %27 : vector<1x1x1x4x16xf32> to vector<4x16xf32>
    %29 = vector.shape_cast %26 : vector<4x16xf32> to vector<1x1x1x4x16xf32>
    tpu.vector_store %arg5[%c0_49, %c5_50, %c0_51, %c0_52, %c0_53], %29 {strides = array<i32>} : memref<1x16x1x4x16xf32, #tpu.memory_space<vmem>>, vector<1x1x1x4x16xf32>,
    %c0_54 = arith.constant 0 : index
    %c0_55 = arith.constant 0 : index
    %c0_56 = arith.constant 0 : index
    %c6 = arith.constant 6 : index
    %c0_57 = arith.constant 0 : index
    %30 = vector.load %arg4[%c0_54, %c0_55, %c0_56, %c6, %c0_57] : memref<1x4x1x16x16xf32, #tpu.memory_space<vmem>>, vector<1x4x1x1x16xf32>
    %31 = vector.shape_cast %30 : vector<1x4x1x1x16xf32> to vector<4x16xf32>
    %c0_58 = arith.constant 0 : index
    %c6_59 = arith.constant 6 : index
    %c0_60 = arith.constant 0 : index
    %c0_61 = arith.constant 0 : index
    %c0_62 = arith.constant 0 : index
    %32 = vector.load %arg5[%c0_58, %c6_59, %c0_60, %c0_61, %c0_62] : memref<1x16x1x4x16xf32, #tpu.memory_space<vmem>>, vector<1x1x1x4x16xf32>
    %33 = vector.shape_cast %32 : vector<1x1x1x4x16xf32> to vector<4x16xf32>
    %34 = vector.shape_cast %31 : vector<4x16xf32> to vector<1x1x1x4x16xf32>
    tpu.vector_store %arg5[%c0_58, %c6_59, %c0_60, %c0_61, %c0_62], %34 {strides = array<i32>} : memref<1x16x1x4x16xf32, #tpu.memory_space<vmem>>, vector<1x1x1x4x16xf32>,
    %c0_63 = arith.constant 0 : index
    %c0_64 = arith.constant 0 : index
    %c0_65 = arith.constant 0 : index
    %c7 = arith.constant 7 : index
    %c0_66 = arith.constant 0 : index
    %35 = vector.load %arg4[%c0_63, %c0_64, %c0_65, %c7, %c0_66] : memref<1x4x1x16x16xf32, #tpu.memory_space<vmem>>, vector<1x4x1x1x16xf32>
    %36 = vector.shape_cast %35 : vector<1x4x1x1x16xf32> to vector<4x16xf32>
    %c0_67 = arith.constant 0 : index
    %c7_68 = arith.constant 7 : index
    %c0_69 = arith.constant 0 : index
    %c0_70 = arith.constant 0 : index
    %c0_71 = arith.constant 0 : index
    %37 = vector.load %arg5[%c0_67, %c7_68, %c0_69, %c0_70, %c0_71] : memref<1x16x1x4x16xf32, #tpu.memory_space<vmem>>, vector<1x1x1x4x16xf32>
    %38 = vector.shape_cast %37 : vector<1x1x1x4x16xf32> to vector<4x16xf32>
    %39 = vector.shape_cast %36 : vector<4x16xf32> to vector<1x1x1x4x16xf32>
    tpu.vector_store %arg5[%c0_67, %c7_68, %c0_69, %c0_70, %c0_71], %39 {strides = array<i32>} : memref<1x16x1x4x16xf32, #tpu.memory_space<vmem>>, vector<1x1x1x4x16xf32>,
    %c0_72 = arith.constant 0 : index
    %c0_73 = arith.constant 0 : index
    %c0_74 = arith.constant 0 : index
    %c8 = arith.constant 8 : index
    %c0_75 = arith.constant 0 : index
    %40 = vector.load %arg4[%c0_72, %c0_73, %c0_74, %c8, %c0_75] : memref<1x4x1x16x16xf32, #tpu.memory_space<vmem>>, vector<1x4x1x1x16xf32>
    %41 = vector.shape_cast %40 : vector<1x4x1x1x16xf32> to vector<4x16xf32>
    %c0_76 = arith.constant 0 : index
    %c8_77 = arith.constant 8 : index
    %c0_78 = arith.constant 0 : index
    %c0_79 = arith.constant 0 : index
    %c0_80 = arith.constant 0 : index
    %42 = vector.load %arg5[%c0_76, %c8_77, %c0_78, %c0_79, %c0_80] : memref<1x16x1x4x16xf32, #tpu.memory_space<vmem>>, vector<1x1x1x4x16xf32>
    %43 = vector.shape_cast %42 : vector<1x1x1x4x16xf32> to vector<4x16xf32>
    %44 = vector.shape_cast %41 : vector<4x16xf32> to vector<1x1x1x4x16xf32>
    tpu.vector_store %arg5[%c0_76, %c8_77, %c0_78, %c0_79, %c0_80], %44 {strides = array<i32>} : memref<1x16x1x4x16xf32, #tpu.memory_space<vmem>>, vector<1x1x1x4x16xf32>,
    %c0_81 = arith.constant 0 : index
    %c0_82 = arith.constant 0 : index
    %c0_83 = arith.constant 0 : index
    %c9 = arith.constant 9 : index
    %c0_84 = arith.constant 0 : index
    %45 = vector.load %arg4[%c0_81, %c0_82, %c0_83, %c9, %c0_84] : memref<1x4x1x16x16xf32, #tpu.memory_space<vmem>>, vector<1x4x1x1x16xf32>
    %46 = vector.shape_cast %45 : vector<1x4x1x1x16xf32> to vector<4x16xf32>
    %c0_85 = arith.constant 0 : index
    %c9_86 = arith.constant 9 : index
    %c0_87 = arith.constant 0 : index
    %c0_88 = arith.constant 0 : index
    %c0_89 = arith.constant 0 : index
    %47 = vector.load %arg5[%c0_85, %c9_86, %c0_87, %c0_88, %c0_89] : memref<1x16x1x4x16xf32, #tpu.memory_space<vmem>>, vector<1x1x1x4x16xf32>
    %48 = vector.shape_cast %47 : vector<1x1x1x4x16xf32> to vector<4x16xf32>
    %49 = vector.shape_cast %46 : vector<4x16xf32> to vector<1x1x1x4x16xf32>
    tpu.vector_store %arg5[%c0_85, %c9_86, %c0_87, %c0_88, %c0_89], %49 {strides = array<i32>} : memref<1x16x1x4x16xf32, #tpu.memory_space<vmem>>, vector<1x1x1x4x16xf32>,
    %c0_90 = arith.constant 0 : index
    %c0_91 = arith.constant 0 : index
    %c0_92 = arith.constant 0 : index
    %c10 = arith.constant 10 : index
    %c0_93 = arith.constant 0 : index
    %50 = vector.load %arg4[%c0_90, %c0_91, %c0_92, %c10, %c0_93] : memref<1x4x1x16x16xf32, #tpu.memory_space<vmem>>, vector<1x4x1x1x16xf32>
    %51 = vector.shape_cast %50 : vector<1x4x1x1x16xf32> to vector<4x16xf32>
    %c0_94 = arith.constant 0 : index
    %c10_95 = arith.constant 10 : index
    %c0_96 = arith.constant 0 : index
    %c0_97 = arith.constant 0 : index
    %c0_98 = arith.constant 0 : index
    %52 = vector.load %arg5[%c0_94, %c10_95, %c0_96, %c0_97, %c0_98] : memref<1x16x1x4x16xf32, #tpu.memory_space<vmem>>, vector<1x1x1x4x16xf32>
    %53 = vector.shape_cast %52 : vector<1x1x1x4x16xf32> to vector<4x16xf32>
    %54 = vector.shape_cast %51 : vector<4x16xf32> to vector<1x1x1x4x16xf32>
    tpu.vector_store %arg5[%c0_94, %c10_95, %c0_96, %c0_97, %c0_98], %54 {strides = array<i32>} : memref<1x16x1x4x16xf32, #tpu.memory_space<vmem>>, vector<1x1x1x4x16xf32>,
    %c0_99 = arith.constant 0 : index
    %c0_100 = arith.constant 0 : index
    %c0_101 = arith.constant 0 : index
    %c11 = arith.constant 11 : index
    %c0_102 = arith.constant 0 : index
    %55 = vector.load %arg4[%c0_99, %c0_100, %c0_101, %c11, %c0_102] : memref<1x4x1x16x16xf32, #tpu.memory_space<vmem>>, vector<1x4x1x1x16xf32>
    %56 = vector.shape_cast %55 : vector<1x4x1x1x16xf32> to vector<4x16xf32>
    %c0_103 = arith.constant 0 : index
    %c11_104 = arith.constant 11 : index
    %c0_105 = arith.constant 0 : index
    %c0_106 = arith.constant 0 : index
    %c0_107 = arith.constant 0 : index
    %57 = vector.load %arg5[%c0_103, %c11_104, %c0_105, %c0_106, %c0_107] : memref<1x16x1x4x16xf32, #tpu.memory_space<vmem>>, vector<1x1x1x4x16xf32>
    %58 = vector.shape_cast %57 : vector<1x1x1x4x16xf32> to vector<4x16xf32>
    %59 = vector.shape_cast %56 : vector<4x16xf32> to vector<1x1x1x4x16xf32>
    tpu.vector_store %arg5[%c0_103, %c11_104, %c0_105, %c0_106, %c0_107], %59 {strides = array<i32>} : memref<1x16x1x4x16xf32, #tpu.memory_space<vmem>>, vector<1x1x1x4x16xf32>,
    %c0_108 = arith.constant 0 : index
    %c0_109 = arith.constant 0 : index
    %c0_110 = arith.constant 0 : index
    %c12 = arith.constant 12 : index
    %c0_111 = arith.constant 0 : index
    %60 = vector.load %arg4[%c0_108, %c0_109, %c0_110, %c12, %c0_111] : memref<1x4x1x16x16xf32, #tpu.memory_space<vmem>>, vector<1x4x1x1x16xf32>
    %61 = vector.shape_cast %60 : vector<1x4x1x1x16xf32> to vector<4x16xf32>
    %c0_112 = arith.constant 0 : index
    %c12_113 = arith.constant 12 : index
    %c0_114 = arith.constant 0 : index
    %c0_115 = arith.constant 0 : index
    %c0_116 = arith.constant 0 : index
    %62 = vector.load %arg5[%c0_112, %c12_113, %c0_114, %c0_115, %c0_116] : memref<1x16x1x4x16xf32, #tpu.memory_space<vmem>>, vector<1x1x1x4x16xf32>
    %63 = vector.shape_cast %62 : vector<1x1x1x4x16xf32> to vector<4x16xf32>
    %64 = vector.shape_cast %61 : vector<4x16xf32> to vector<1x1x1x4x16xf32>
    tpu.vector_store %arg5[%c0_112, %c12_113, %c0_114, %c0_115, %c0_116], %64 {strides = array<i32>} : memref<1x16x1x4x16xf32, #tpu.memory_space<vmem>>, vector<1x1x1x4x16xf32>,
    %c0_117 = arith.constant 0 : index
    %c0_118 = arith.constant 0 : index
    %c0_119 = arith.constant 0 : index
    %c13 = arith.constant 13 : index
    %c0_120 = arith.constant 0 : index
    %65 = vector.load %arg4[%c0_117, %c0_118, %c0_119, %c13, %c0_120] : memref<1x4x1x16x16xf32, #tpu.memory_space<vmem>>, vector<1x4x1x1x16xf32>
    %66 = vector.shape_cast %65 : vector<1x4x1x1x16xf32> to vector<4x16xf32>
    %c0_121 = arith.constant 0 : index
    %c13_122 = arith.constant 13 : index
    %c0_123 = arith.constant 0 : index
    %c0_124 = arith.constant 0 : index
    %c0_125 = arith.constant 0 : index
    %67 = vector.load %arg5[%c0_121, %c13_122, %c0_123, %c0_124, %c0_125] : memref<1x16x1x4x16xf32, #tpu.memory_space<vmem>>, vector<1x1x1x4x16xf32>
    %68 = vector.shape_cast %67 : vector<1x1x1x4x16xf32> to vector<4x16xf32>
    %69 = vector.shape_cast %66 : vector<4x16xf32> to vector<1x1x1x4x16xf32>
    tpu.vector_store %arg5[%c0_121, %c13_122, %c0_123, %c0_124, %c0_125], %69 {strides = array<i32>} : memref<1x16x1x4x16xf32, #tpu.memory_space<vmem>>, vector<1x1x1x4x16xf32>,
    %c0_126 = arith.constant 0 : index
    %c0_127 = arith.constant 0 : index
    %c0_128 = arith.constant 0 : index
    %c14 = arith.constant 14 : index
    %c0_129 = arith.constant 0 : index
    %70 = vector.load %arg4[%c0_126, %c0_127, %c0_128, %c14, %c0_129] : memref<1x4x1x16x16xf32, #tpu.memory_space<vmem>>, vector<1x4x1x1x16xf32>
    %71 = vector.shape_cast %70 : vector<1x4x1x1x16xf32> to vector<4x16xf32>
    %c0_130 = arith.constant 0 : index
    %c14_131 = arith.constant 14 : index
    %c0_132 = arith.constant 0 : index
    %c0_133 = arith.constant 0 : index
    %c0_134 = arith.constant 0 : index
    %72 = vector.load %arg5[%c0_130, %c14_131, %c0_132, %c0_133, %c0_134] : memref<1x16x1x4x16xf32, #tpu.memory_space<vmem>>, vector<1x1x1x4x16xf32>
    %73 = vector.shape_cast %72 : vector<1x1x1x4x16xf32> to vector<4x16xf32>
    %74 = vector.shape_cast %71 : vector<4x16xf32> to vector<1x1x1x4x16xf32>
    tpu.vector_store %arg5[%c0_130, %c14_131, %c0_132, %c0_133, %c0_134], %74 {strides = array<i32>} : memref<1x16x1x4x16xf32, #tpu.memory_space<vmem>>, vector<1x1x1x4x16xf32>,
    %c0_135 = arith.constant 0 : index
    %c0_136 = arith.constant 0 : index
    %c0_137 = arith.constant 0 : index
    %c15 = arith.constant 15 : index
    %c0_138 = arith.constant 0 : index
    %75 = vector.load %arg4[%c0_135, %c0_136, %c0_137, %c15, %c0_138] : memref<1x4x1x16x16xf32, #tpu.memory_space<vmem>>, vector<1x4x1x1x16xf32>
    %76 = vector.shape_cast %75 : vector<1x4x1x1x16xf32> to vector<4x16xf32>
    %c0_139 = arith.constant 0 : index
    %c15_140 = arith.constant 15 : index
    %c0_141 = arith.constant 0 : index
    %c0_142 = arith.constant 0 : index
    %c0_143 = arith.constant 0 : index
    %77 = vector.load %arg5[%c0_139, %c15_140, %c0_141, %c0_142, %c0_143] : memref<1x16x1x4x16xf32, #tpu.memory_space<vmem>>, vector<1x1x1x4x16xf32>
    %78 = vector.shape_cast %77 : vector<1x1x1x4x16xf32> to vector<4x16xf32>
    %79 = vector.shape_cast %76 : vector<4x16xf32> to vector<1x1x1x4x16xf32>
    tpu.vector_store %arg5[%c0_139, %c15_140, %c0_141, %c0_142, %c0_143], %79 {strides = array<i32>} : memref<1x16x1x4x16xf32, #tpu.memory_space<vmem>>, vector<1x1x1x4x16xf32>,
    return
  }
  func.func @transform_0(%arg0: i32, %arg1: i32, %arg2: i32, %arg3: i32) -> (i32, i32, i32, i32, i32) {
    %c0_i32 = arith.constant 0 : i32
    %c0_i32_0 = arith.constant 0 : i32
    return %arg0, %arg2, %arg1, %arg3, %c0_i32 : i32, i32, i32, i32, i32
  }
  func.func @transform_1(%arg0: i32, %arg1: i32, %arg2: i32, %arg3: i32) -> (i32, i32, i32, i32, i32) {
    %c0_i32 = arith.constant 0 : i32
    %c0_i32_0 = arith.constant 0 : i32
    return %arg0, %arg3, %arg1, %arg2, %c0_i32 : i32, i32, i32, i32, i32
  }
}

</mosaic_0001>

<llo_original>
// kernel: tpu_custom_call.1
$region0: #{tpu_custom_call.1}
  #allocation0 [shape = 'u32[]', space=smem, size = 0x4, offset = 0x4, fixed_abs, tag = 'smem constant byte address 0x4 - core index']
  #allocation1 [shape = 'u32[144,128]{1,0:T(1,128)}', space=vmem, size = 0x12000, scoped, tag = 'internal scratch']
  %s0 = inlined_call_operand.hbm [shape: f32[2,4,1,16,16], index: 0, kind: input, shape index: {}]
  %s1 = inlined_call_operand.hbm [shape: f32[2,16,1,4,16], index: 1, kind: output, shape index: {}]
  %s2 = sld [smem:[#allocation0]]
  $region41: #{tpu_custom_call.1} parent=0
    _
  %s4 = ssub.s32 1, %s2
  %s5 = scalar_select 0, %s4, %s2
  $region1: #{tpu_custom_call.1} parent=0
    #allocation2 [shape = 'u8[65536]{0}', space=vmem, size = 0x10000, scoped, tag = 'input window, operand 0']
    #allocation3 [shape = 's32[2]{0}', space=sflag, size = 0x8, scoped, tag = 'scoped memory for tpu_custom_call.1']
    #allocation4 [shape = 's32[2]{0}', space=sflag, size = 0x8, scoped, tag = 'scoped memory for tpu_custom_call.1']
    #allocation5 [shape = 'u8[65536]{0}', space=vmem, size = 0x10000, scoped, tag = 'output window, operand 0']
    %6 = vsyncpa [#allocation3], 0
    %s7 = scalar_lea.sflag [#allocation3], 1
    %8 = vsyncpa %s7, 0
    %9 = vsyncpa [#allocation4], 0
    %s10 = scalar_lea.sflag [#allocation4], 1
    %11 = vsyncpa %s10, 0
    loop: start=0, step=1, limit=4
    $region2: #{tpu_custom_call.1} parent=1 // loop_pre_header
      _
    $region3: #{tpu_custom_call.1} parent=1 // loop_header
      %s13 = sphi 0, %s17
      %p14 = scmp.ge.s32.totalorder %s13, 4
      %s20 = sphi 0, %s46
      %s21 = sphi 0, %s42
      %s22 = sphi 0, %s38
      %s23 = sphi 0, %s34
      %s24 = sphi 0, %s20
      %s25 = sphi 0, %s21
      %s26 = sphi 0, %s22
      %s27 = sphi 0, %s23
      %s28 = sphi 0, %s24
      %s29 = sphi 0, %s25
      %s30 = sphi 0, %s26
      %s31 = sphi 0, %s27
      %s55 = sphi 0, %s57
      %s58 = sphi 0, %s55
      %s59 = sphi 0, %s58
      %s75 = sphi 0, %s59
      %s87 = sphi 0, %s89
      %s90 = sphi 0, %s87
      %s91 = sphi 0, %s90
      %s107 = sphi 0, %s91
    $region4: #{tpu_custom_call.1} parent=1 // loop_header_branch
      %16 = sbr.rel (%p14) target = $region8
    $region5: #{tpu_custom_call.1} parent=1 // loop_body
      %s18 = ssub.s32 %s13, 1
      %s19 = ssub.s32 %s13, 2
      %s32 = sadd.s32 1, %s23
      %p33 = scmp.ge.s32.totalorder %s32, 1
      %s34 = scalar_select %p33, 0, %s32
      %s35 = sadd.s32 1, %s22
      %s36 = scalar_select %p33, %s35, %s22
      %p37 = scmp.ge.s32.totalorder %s36, 1
      %s38 = scalar_select %p37, 0, %s36
      %s39 = sadd.s32 1, %s21
      %s40 = scalar_select %p37, %s39, %s21
      %p41 = scmp.ge.s32.totalorder %s40, 1
      %s42 = scalar_select %p41, 0, %s40
      %s43 = sadd.s32 1, %s20
      %s44 = scalar_select %p41, %s43, %s20
      %p45 = scmp.ge.s32.totalorder %s44, 2
      %s46 = scalar_select %p45, 0, %s44
      %s47 = ssub.s32 %s20, %s46
      %s48 = ssub.s32 %s22, %s38
      %s49 = sor.u32 %s47, %s48
      %s50 = ssub.s32 %s21, %s42
      %s51 = sor.u32 %s49, %s50
      %s52 = ssub.s32 %s23, %s34
      %s53 = sor.u32 %s51, %s52
      %p54 = scmp.eq.s32.totalorder %s53, 0
      %s56 = sadd.s32 %s55, 1
      %s57 = scalar_select %p54, %s55, %s56
      %p60 = pneg %p54
      %p61 = scmp.eq.s32.totalorder %s13, 1
      %p62 = por %p60, %p61
      %p63 = scmp.ne.s32.totalorder %s55, %s58
      %p64 = scmp.eq.s32.totalorder %s13, 0
      %p65 = por %p63, %p64
      %p66 = scmp.ne.s32.totalorder %s55, %s58
      %p67 = scmp.eq.s32.totalorder %s18, 1
      %p68 = por %p66, %p67
      %p69 = scmp.ne.s32.totalorder %s58, %s59
      %p70 = scmp.eq.s32.totalorder %s18, 0
      %p71 = por %p69, %p70
      %p72 = scmp.ne.s32.totalorder %s58, %s59
      %p73 = scmp.eq.s32.totalorder %s19, 1
      %p74 = por %p72, %p73
      %p76 = scmp.ne.s32.totalorder %s59, %s75
      %p77 = scmp.eq.s32.totalorder %s19, 0
      %p78 = por %p76, %p77
      %s79 = ssub.s32 %s20, %s46
      %s80 = ssub.s32 %s23, %s34
      %s81 = sor.u32 %s79, %s80
      %s82 = ssub.s32 %s21, %s42
      %s83 = sor.u32 %s81, %s82
      %s84 = ssub.s32 %s22, %s38
      %s85 = sor.u32 %s83, %s84
      %p86 = scmp.eq.s32.totalorder %s85, 0
      %s88 = sadd.s32 %s87, 1
      %s89 = scalar_select %p86, %s87, %s88
      %p92 = pneg %p86
      %p93 = scmp.eq.s32.totalorder %s13, 1
      %p94 = por %p92, %p93
      %p95 = scmp.ne.s32.totalorder %s87, %s90
      %p96 = scmp.eq.s32.totalorder %s13, 0
      %p97 = por %p95, %p96
      %p98 = scmp.ne.s32.totalorder %s87, %s90
      %p99 = scmp.eq.s32.totalorder %s18, 1
      %p100 = por %p98, %p99
      %p101 = scmp.ne.s32.totalorder %s90, %s91
      %p102 = scmp.eq.s32.totalorder %s18, 0
      %p103 = por %p101, %p102
      %p104 = scmp.ne.s32.totalorder %s90, %s91
      %p105 = scmp.eq.s32.totalorder %s19, 1
      %p106 = por %p104, %p105
      %p108 = scmp.ne.s32.totalorder %s91, %s107
      %p109 = scmp.eq.s32.totalorder %s19, 0
      %p110 = por %p108, %p109
      %p111 = scmp.le.s32.totalorder 1, %s13
      %p112 = scmp.lt.s32.totalorder %s13, 3
      %p113 = pnand %p111, %p112
      %p114 = pneg %p113
      // Predicated region
      $region9: #{tpu_custom_call.1} parent=5 // pred_check
        _
      $region10: #{tpu_custom_call.1} parent=5 // pred_check_branch
        %116 = sbr.rel (%p113) target = $region12
      $region11: #{tpu_custom_call.1} parent=5 // pred_region
        %s117 = ssub.s32 %s13, 1
      $region12: #{tpu_custom_call.1} parent=5 // pred_fallthru
        _
      %p118 = scmp.lt.s32.totalorder %s13, 2
      // Predicated region
      $region13: #{tpu_custom_call.1} parent=5 // pred_check
        %p119 = pneg %p118
      $region14: #{tpu_custom_call.1} parent=5 // pred_check_branch
        %121 = sbr.rel (%p119) target = $region16
      $region15: #{tpu_custom_call.1} parent=5 // pred_region
        // Predicated region
        $region17: #{tpu_custom_call.1} parent=15 // pred_check
          %p122 = pneg %p65
        $region18: #{tpu_custom_call.1} parent=15 // pred_check_branch
          %124 = sbr.rel (%p122) target = $region20
        $region19: #{tpu_custom_call.1} parent=15 // pred_region
          %s125 = sand.u32 %s55, 1
          %s126 = scalar_lea.sflag [#allocation3], %s125
          %s127 = sand.u32 %s55, 1
          %s128 = smul.addr %s127, 64
          %s129 = scalar_lea.vmem [#allocation2], %s128
          %s130 = smul.u32 4, %s22
          %s131 = smul.u32 2, %s23
          %s133 = ssub.s32 1024, 1024
          %134 = vsyncadd %s126, %s133
          %s135 = smul.addr %s21, 2
          %s136 = sadd.s32 %s131, %s135
          %s137 = smul.addr %s130, 2
          %s138 = sadd.s32 %s136, %s137
          %s139 = smul.addr %s20, 8
          %s140 = sadd.s32 %s138, %s139
          %s141 = smul.addr %s140, 128
          %s142 = scalar_lea.hbm %s0, %s141
          %s143 = sshll.u32 %s129, 4
          %s144 = int_to_ptr.vmem [resolvable:$true] %s143
          %149 = dma.hbm_to_vmem [thread:$0]  %s142, 1024, %s144, %s126, 128, 128, 8
        $region20: #{tpu_custom_call.1} parent=15 // pred_fallthru
          _
      $region16: #{tpu_custom_call.1} parent=5 // pred_fallthru
        _
      %p150 = scmp.le.s32.totalorder 1, %s13
      %p151 = scmp.lt.s32.totalorder %s13, 3
      %p152 = pnand %p150, %p151
      %p153 = pneg %p152
      // Predicated region
      $region21: #{tpu_custom_call.1} parent=5 // pred_check
        _
      $region22: #{tpu_custom_call.1} parent=5 // pred_check_branch
        %155 = sbr.rel (%p152) target = $region24
      $region23: #{tpu_custom_call.1} parent=5 // pred_region
        %s156 = ssub.s32 %s13, 1
        %s157 = sand.u32 %s58, 1
        %s158 = scalar_lea.sflag [#allocation3], %s157
        %s159 = sand.u32 %s58, 1
        %s160 = smul.addr %s159, 64
        %s161 = scalar_lea.vmem [#allocation2], %s160
        // Predicated region
        $region25: #{tpu_custom_call.1} parent=23 // pred_check
          %p162 = pneg %p71
        $region26: #{tpu_custom_call.1} parent=23 // pred_check_branch
          %164 = sbr.rel (%p162) target = $region28
        $region27: #{tpu_custom_call.1} parent=23 // pred_region
          %165 = dma.done %s158, 1024
        $region28: #{tpu_custom_call.1} parent=23 // pred_fallthru
          _
        %s166 = sand.u32 %s58, 1
        %s167 = scalar_lea.sflag [#allocation3], %s166
        %s168 = sand.u32 %s58, 1
        %s169 = smul.addr %s168, 64
        %s170 = scalar_lea.vmem [#allocation2], %s169
        %p171 = pneg %p71
        %p172 = pneg %p68
        %p173 = pneg %p103
        %p174 = pneg %p100
        %s175 = sand.u32 %s90, 1
        %s176 = scalar_lea.sflag [#allocation4], %s175
        %s177 = sand.u32 %s90, 1
        %s178 = smul.addr %s177, 64
        %s179 = scalar_lea.vmem [#allocation5], %s178
        %s180 = smul.u32 4, %s26
        %s181 = smul.u32 2, %s27
        %s182 = smul.u32 16, %s27
        %v183 = vld [vmem:[%s161] sm:$0x1]
        %v184 = vld [vmem:[%s161 + $0x10] sm:$0x1]
        %v185 = vld [vmem:[%s161 + $0x20] sm:$0x1]
        %v186 = vld [vmem:[%s161 + $0x30] sm:$0x1]
        %v191 = vrot.slane %v184, 7
        %vm192 = vcmask 1041409
        %v193 = vsel %vm192, %v191, %v183
        %v194 = vrot.slane %v185, 6
        %vm195 = vcmask 1042434
        %v196 = vsel %vm195, %v194, %v193
        %v197 = vrot.slane %v186, 5
        %vm198 = vcmask 1043459
        %v199 = vsel %vm198, %v197, %v196
        %vm201 = vcmask 125952
        %202 = vst.msk [vmem:[%s179] sm:$0xf] %vm201, %v199
        %v203 = vld [vmem:[%s161 + $0x1] sm:$0x1]
        %v204 = vld [vmem:[%s161 + $0x11] sm:$0x1]
        %v205 = vld [vmem:[%s161 + $0x21] sm:$0x1]
        %v206 = vld [vmem:[%s161 + $0x31] sm:$0x1]
        %v211 = vrot.slane %v204, 7
        %v212 = vsel %vm192, %v211, %v203
        %v213 = vrot.slane %v205, 6
        %v214 = vsel %vm195, %v213, %v212
        %v215 = vrot.slane %v206, 5
        %v216 = vsel %vm198, %v215, %v214
        %s218 = scalar_lea.vmem %s179, 4 [#allocation5]
        %219 = vst.msk [vmem:[%s218] sm:$0xf] %vm201, %v216
        %v220 = vld [vmem:[%s161 + $0x2] sm:$0x1]
        %v221 = vld [vmem:[%s161 + $0x12] sm:$0x1]
        %v222 = vld [vmem:[%s161 + $0x22] sm:$0x1]
        %v223 = vld [vmem:[%s161 + $0x32] sm:$0x1]
        %v228 = vrot.slane %v221, 7
        %v229 = vsel %vm192, %v228, %v220
        %v230 = vrot.slane %v222, 6
        %v231 = vsel %vm195, %v230, %v229
        %v232 = vrot.slane %v223, 5
        %v233 = vsel %vm198, %v232, %v231
        %s235 = scalar_lea.vmem %s179, 8 [#allocation5]
        %236 = vst.msk [vmem:[%s235] sm:$0xf] %vm201, %v233
        %v237 = vld [vmem:[%s161 + $0x3] sm:$0x1]
        %v238 = vld [vmem:[%s161 + $0x13] sm:$0x1]
        %v239 = vld [vmem:[%s161 + $0x23] sm:$0x1]
        %v240 = vld [vmem:[%s161 + $0x33] sm:$0x1]
        %v245 = vrot.slane %v238, 7
        %v246 = vsel %vm192, %v245, %v237
        %v247 = vrot.slane %v239, 6
        %v248 = vsel %vm195, %v247, %v246
        %v249 = vrot.slane %v240, 5
        %v250 = vsel %vm198, %v249, %v248
        %s252 = scalar_lea.vmem %s179, 12 [#allocation5]
        %253 = vst.msk [vmem:[%s252] sm:$0xf] %vm201, %v250
        %v254 = vld [vmem:[%s161 + $0x4] sm:$0x1]
        %v255 = vld [vmem:[%s161 + $0x14] sm:$0x1]
        %v256 = vld [vmem:[%s161 + $0x24] sm:$0x1]
        %v257 = vld [vmem:[%s161 + $0x34] sm:$0x1]
        %v262 = vrot.slane %v255, 7
        %v263 = vsel %vm192, %v262, %v254
        %v264 = vrot.slane %v256, 6
        %v265 = vsel %vm195, %v264, %v263
        %v266 = vrot.slane %v257, 5
        %v267 = vsel %vm198, %v266, %v265
        %s269 = scalar_lea.vmem %s179, 16 [#allocation5]
        %270 = vst.msk [vmem:[%s269] sm:$0xf] %vm201, %v267
        %v271 = vld [vmem:[%s161 + $0x5] sm:$0x1]
        %v272 = vld [vmem:[%s161 + $0x15] sm:$0x1]
        %v273 = vld [vmem:[%s161 + $0x25] sm:$0x1]
        %v274 = vld [vmem:[%s161 + $0x35] sm:$0x1]
        %v279 = vrot.slane %v272, 7
        %v280 = vsel %vm192, %v279, %v271
        %v281 = vrot.slane %v273, 6
        %v282 = vsel %vm195, %v281, %v280
        %v283 = vrot.slane %v274, 5
        %v284 = vsel %vm198, %v283, %v282
        %s286 = scalar_lea.vmem %s179, 20 [#allocation5]
        %287 = vst.msk [vmem:[%s286] sm:$0xf] %vm201, %v284
        %v288 = vld [vmem:[%s161 + $0x6] sm:$0x1]
        %v289 = vld [vmem:[%s161 + $0x16] sm:$0x1]
        %v290 = vld [vmem:[%s161 + $0x26] sm:$0x1]
        %v291 = vld [vmem:[%s161 + $0x36] sm:$0x1]
        %v296 = vrot.slane %v289, 7
        %v297 = vsel %vm192, %v296, %v288
        %v298 = vrot.slane %v290, 6
        %v299 = vsel %vm195, %v298, %v297
        %v300 = vrot.slane %v291, 5
        %v301 = vsel %vm198, %v300, %v299
        %s303 = scalar_lea.vmem %s179, 24 [#allocation5]
        %304 = vst.msk [vmem:[%s303] sm:$0xf] %vm201, %v301
        %v305 = vld [vmem:[%s161 + $0x7] sm:$0x1]
        %v306 = vld [vmem:[%s161 + $0x17] sm:$0x1]
        %v307 = vld [vmem:[%s161 + $0x27] sm:$0x1]
        %v308 = vld [vmem:[%s161 + $0x37] sm:$0x1]
        %v313 = vrot.slane %v306, 7
        %v314 = vsel %vm192, %v313, %v305
        %v315 = vrot.slane %v307, 6
        %v316 = vsel %vm195, %v315, %v314
        %v317 = vrot.slane %v308, 5
        %v318 = vsel %vm198, %v317, %v316
        %s320 = scalar_lea.vmem %s179, 28 [#allocation5]
        %321 = vst.msk [vmem:[%s320] sm:$0xf] %vm201, %v318
        %v322 = vld [vmem:[%s161 + $0x8] sm:$0x1]
        %v323 = vld [vmem:[%s161 + $0x18] sm:$0x1]
        %v324 = vld [vmem:[%s161 + $0x28] sm:$0x1]
        %v325 = vld [vmem:[%s161 + $0x38] sm:$0x1]
        %v330 = vrot.slane %v323, 7
        %v331 = vsel %vm192, %v330, %v322
        %v332 = vrot.slane %v324, 6
        %v333 = vsel %vm195, %v332, %v331
        %v334 = vrot.slane %v325, 5
        %v335 = vsel %vm198, %v334, %v333
        %s337 = scalar_lea.vmem %s179, 32 [#allocation5]
        %338 = vst.msk [vmem:[%s337] sm:$0xf] %vm201, %v335
        %v339 = vld [vmem:[%s161 + $0x9] sm:$0x1]
        %v340 = vld [vmem:[%s161 + $0x19] sm:$0x1]
        %v341 = vld [vmem:[%s161 + $0x29] sm:$0x1]
        %v342 = vld [vmem:[%s161 + $0x39] sm:$0x1]
        %v347 = vrot.slane %v340, 7
        %v348 = vsel %vm192, %v347, %v339
        %v349 = vrot.slane %v341, 6
        %v350 = vsel %vm195, %v349, %v348
        %v351 = vrot.slane %v342, 5
        %v352 = vsel %vm198, %v351, %v350
        %s354 = scalar_lea.vmem %s179, 36 [#allocation5]
        %355 = vst.msk [vmem:[%s354] sm:$0xf] %vm201, %v352
        %v356 = vld [vmem:[%s161 + $0xa] sm:$0x1]
        %v357 = vld [vmem:[%s161 + $0x1a] sm:$0x1]
        %v358 = vld [vmem:[%s161 + $0x2a] sm:$0x1]
        %v359 = vld [vmem:[%s161 + $0x3a] sm:$0x1]
        %v364 = vrot.slane %v357, 7
        %v365 = vsel %vm192, %v364, %v356
        %v366 = vrot.slane %v358, 6
        %v367 = vsel %vm195, %v366, %v365
        %v368 = vrot.slane %v359, 5
        %v369 = vsel %vm198, %v368, %v367
        %s371 = scalar_lea.vmem %s179, 40 [#allocation5]
        %372 = vst.msk [vmem:[%s371] sm:$0xf] %vm201, %v369
        %v373 = vld [vmem:[%s161 + $0xb] sm:$0x1]
        %v374 = vld [vmem:[%s161 + $0x1b] sm:$0x1]
        %v375 = vld [vmem:[%s161 + $0x2b] sm:$0x1]
        %v376 = vld [vmem:[%s161 + $0x3b] sm:$0x1]
        %v381 = vrot.slane %v374, 7
        %v382 = vsel %vm192, %v381, %v373
        %v383 = vrot.slane %v375, 6
        %v384 = vsel %vm195, %v383, %v382
        %v385 = vrot.slane %v376, 5
        %v386 = vsel %vm198, %v385, %v384
        %s388 = scalar_lea.vmem %s179, 44 [#allocation5]
        %389 = vst.msk [vmem:[%s388] sm:$0xf] %vm201, %v386
        %v390 = vld [vmem:[%s161 + $0xc] sm:$0x1]
        %v391 = vld [vmem:[%s161 + $0x1c] sm:$0x1]
        %v392 = vld [vmem:[%s161 + $0x2c] sm:$0x1]
        %v393 = vld [vmem:[%s161 + $0x3c] sm:$0x1]
        %v398 = vrot.slane %v391, 7
        %v399 = vsel %vm192, %v398, %v390
        %v400 = vrot.slane %v392, 6
        %v401 = vsel %vm195, %v400, %v399
        %v402 = vrot.slane %v393, 5
        %v403 = vsel %vm198, %v402, %v401
        %s405 = scalar_lea.vmem %s179, 48 [#allocation5]
        %406 = vst.msk [vmem:[%s405] sm:$0xf] %vm201, %v403
        %v407 = vld [vmem:[%s161 + $0xd] sm:$0x1]
        %v408 = vld [vmem:[%s161 + $0x1d] sm:$0x1]
        %v409 = vld [vmem:[%s161 + $0x2d] sm:$0x1]
        %v410 = vld [vmem:[%s161 + $0x3d] sm:$0x1]
        %v415 = vrot.slane %v408, 7
        %v416 = vsel %vm192, %v415, %v407
        %v417 = vrot.slane %v409, 6
        %v418 = vsel %vm195, %v417, %v416
        %v419 = vrot.slane %v410, 5
        %v420 = vsel %vm198, %v419, %v418
        %s422 = scalar_lea.vmem %s179, 52 [#allocation5]
        %423 = vst.msk [vmem:[%s422] sm:$0xf] %vm201, %v420
        %v424 = vld [vmem:[%s161 + $0xe] sm:$0x1]
        %v425 = vld [vmem:[%s161 + $0x1e] sm:$0x1]
        %v426 = vld [vmem:[%s161 + $0x2e] sm:$0x1]
        %v427 = vld [vmem:[%s161 + $0x3e] sm:$0x1]
        %v432 = vrot.slane %v425, 7
        %v433 = vsel %vm192, %v432, %v424
        %v434 = vrot.slane %v426, 6
        %v435 = vsel %vm195, %v434, %v433
        %v436 = vrot.slane %v427, 5
        %v437 = vsel %vm198, %v436, %v435
        %s439 = scalar_lea.vmem %s179, 56 [#allocation5]
        %440 = vst.msk [vmem:[%s439] sm:$0xf] %vm201, %v437
        %v441 = vld [vmem:[%s161 + $0xf] sm:$0x1]
        %v442 = vld [vmem:[%s161 + $0x1f] sm:$0x1]
        %v443 = vld [vmem:[%s161 + $0x2f] sm:$0x1]
        %v444 = vld [vmem:[%s161 + $0x3f] sm:$0x1]
        %v449 = vrot.slane %v442, 7
        %v450 = vsel %vm192, %v449, %v441
        %v451 = vrot.slane %v443, 6
        %v452 = vsel %vm195, %v451, %v450
        %v453 = vrot.slane %v444, 5
        %v454 = vsel %vm198, %v453, %v452
        %s456 = scalar_lea.vmem %s179, 60 [#allocation5]
        %457 = vst.msk [vmem:[%s456] sm:$0xf] %vm201, %v454
        %s458 = sand.u32 %s90, 1
        %s459 = scalar_lea.sflag [#allocation4], %s458
        %s460 = sand.u32 %s90, 1
        %s461 = smul.addr %s460, 64
        %s462 = scalar_lea.vmem [#allocation5], %s461
        // Predicated region
        $region29: #{tpu_custom_call.1} parent=23 // pred_check
          %p463 = pneg %p100
        $region30: #{tpu_custom_call.1} parent=23 // pred_check_branch
          %465 = sbr.rel (%p463) target = $region32
        $region31: #{tpu_custom_call.1} parent=23 // pred_region
          %s466 = smul.u32 16, %s27
          %s468 = ssub.s32 1024, 1024
          %469 = vsyncadd %s459, %s468
          %s470 = sadd.s32 %s26, %s25
          %s471 = sadd.s32 %s470, %s466
          %s472 = smul.addr %s24, 16
          %s473 = sadd.s32 %s471, %s472
          %s474 = smul.addr %s473, 64
          %s475 = scalar_lea.hbm %s1, %s474
          %s476 = sshll.u32 %s462, 4
          %s477 = int_to_ptr.vmem [resolvable:$true] %s476
          %482 = dma.vmem_to_hbm [thread:$0]  %s477, 1024, %s475, %s459, 64, 64, 4
        $region32: #{tpu_custom_call.1} parent=23 // pred_fallthru
          _
      $region24: #{tpu_custom_call.1} parent=5 // pred_fallthru
        _
      %p483 = scmp.le.s32.totalorder 2, %s13
      // Predicated region
      $region33: #{tpu_custom_call.1} parent=5 // pred_check
        %p484 = pneg %p483
      $region34: #{tpu_custom_call.1} parent=5 // pred_check_branch
        %486 = sbr.rel (%p484) target = $region36
      $region35: #{tpu_custom_call.1} parent=5 // pred_region
        %s487 = ssub.s32 %s13, 2
        // Predicated region
        $region37: #{tpu_custom_call.1} parent=35 // pred_check
          %p488 = pneg %p106
        $region38: #{tpu_custom_call.1} parent=35 // pred_check_branch
          %490 = sbr.rel (%p488) target = $region40
        $region39: #{tpu_custom_call.1} parent=35 // pred_region
          %s491 = sand.u32 %s91, 1
          %s492 = scalar_lea.sflag [#allocation4], %s491
          %s493 = sand.u32 %s91, 1
          %s494 = smul.addr %s493, 64
          %s495 = scalar_lea.vmem [#allocation5], %s494
          %496 = dma.done %s492, 1024
        $region40: #{tpu_custom_call.1} parent=35 // pred_fallthru
          _
      $region36: #{tpu_custom_call.1} parent=5 // pred_fallthru
        _
    $region6: #{tpu_custom_call.1} parent=1 // loop_footer
      %s17 = sadd.s32 1, %s13
    $region7: #{tpu_custom_call.1} parent=1 // loop_footer_branch
      %12 = sbr.rel target = $region3
    $region8: #{tpu_custom_call.1} parent=1 // loop_exit
      _
    %497 = vsyncpa [#allocation3], 1
    %s498 = scalar_lea.sflag [#allocation3], 1
    %499 = vsyncpa %s498, 1
    %500 = vsyncpa [#allocation4], 1
    %s501 = scalar_lea.sflag [#allocation4], 1
    %502 = vsyncpa %s501, 1

</llo_original>
